<compile_context>
chip_gen: v7x
topology: tpu7x:2x2x1
jax: 0.10.0
libtpu: 0.0.40
codegen_flags: <defaults>
</compile_context>

<pallas_src>
import jax
import jax.numpy as jnp
from jax.experimental import pallas as pl
from jax.experimental.pallas import tpu as pltpu


def _round_up(x, m):
    return (x + m - 1) // m * m


# ----------------------------- Pallas kernel ------------------------------ #
def neumf_kernel(u_idx_ref, i_idx_ref, u_tab_ref, i_tab_ref,
                 w1_u_ref, w1_i_ref, b1_ref, w2_gmf_ref, w2_mlp_ref, b2_ref,
                 out_ref):
    # Resident tables, feature-major: [mf_dim + half, num_pad] (bf16).
    u_tab = u_tab_ref[...]
    i_tab = i_tab_ref[...]
    nu = u_tab.shape[1]
    ni = i_tab.shape[1]
    tb = out_ref.shape[1]
    mf = w2_gmf_ref.shape[1]                       # mf_dim (static)

    u_idx = u_idx_ref[...]                         # (1, TB) int32
    i_idx = i_idx_ref[...]

    # Fused embedding gather: one-hot matmul on the MXU (exact for 0/1
    # weights, f32 accumulation).  Table column j selected where iota == idx.
    u_oh = jnp.where(
        jax.lax.broadcasted_iota(jnp.int32, (nu, tb), 0) == u_idx, 1.0, 0.0
    ).astype(u_tab.dtype)
    i_oh = jnp.where(
        jax.lax.broadcasted_iota(jnp.int32, (ni, tb), 0) == i_idx, 1.0, 0.0
    ).astype(i_tab.dtype)
    u_emb = jnp.dot(u_tab, u_oh, preferred_element_type=jnp.float32)  # [mf+half, TB]
    i_emb = jnp.dot(i_tab, i_oh, preferred_element_type=jnp.float32)  # [mf+half, TB]

    # GMF branch: elementwise product of the GMF rows (f32, VPU).
    gmf_out = u_emb[:mf, :] * i_emb[:mf, :]                           # [mf, TB]

    # MLP branch: Linear(16 -> 8) + ReLU, with the input concat folded into
    # two matmuls against the split weight halves.
    h = (jnp.dot(w1_u_ref[...], u_emb[mf:, :], preferred_element_type=jnp.float32)
         + jnp.dot(w1_i_ref[...], i_emb[mf:, :], preferred_element_type=jnp.float32)
         + b1_ref[...])                                               # [hidden, TB]
    mlp_out = jnp.maximum(h, 0.0)

    # Predict layer over concat([gmf_out, mlp_out]) -> two small matmuls.
    pred = (jnp.dot(w2_gmf_ref[...], gmf_out, preferred_element_type=jnp.float32)
            + jnp.dot(w2_mlp_ref[...], mlp_out, preferred_element_type=jnp.float32)
            + b2_ref[0])                                              # [1, TB]
    out_ref[...] = pred


# ------------------------------ call wrapper ------------------------------ #
def _choose_tb(batch, max_tb=8192):
    """Largest batch tile (multiple of 128) that still leaves >=2 grid steps
    when the batch allows it (v7x megacore: two TensorCores share the grid)."""
    pb = _round_up(batch, 128)
    tb = min(max_tb, pb)
    if pb >= 2 * 128:
        tb = min(tb, max(128, (pb // 2) // 128 * 128))
    return tb


def _vmem_limit_bytes(tb, nu, ni, tab_itemsize):
    """Explicit scoped-VMEM budget (v5e default is only 16 MiB)."""
    stream = tb * (2 * (4 + 4) + 2 * 4)                  # dbl-buffered idx + out
    inter = tb * ((nu + ni) * tab_itemsize               # one-hot operands
                  + 2 * 16 * 4 + 3 * 8 * 4)              # f32 intermediates
    tables = (nu + ni) * 16 * tab_itemsize               # resident tables
    est = 2 * (stream + inter) + tables + (2 << 20)
    return int(min(max(est, 16 << 20), 64 << 20))


def neumf_predict_pallas(user_idx, item_idx, user_tab, item_tab,
                         w1_u, w1_i, b1, w2_gmf, w2_mlp, b2, *, tb):
    _, pb = user_idx.shape
    feat, nu = user_tab.shape
    _, ni = item_tab.shape
    hidden, half = w1_u.shape
    mf_dim = w2_gmf.shape[1]
    assert pb % tb == 0 and tb % 128 == 0

    # Batch-tiled streams (batch on the lane axis).
    stream = lambda r: pl.BlockSpec((r, tb), lambda i: (0, i))
    # Weights / tables: same block for every grid step -> DMA'd once, resident.
    const = lambda shape: pl.BlockSpec(shape, lambda i: (0, 0))

    return pl.pallas_call(
        neumf_kernel,
        out_shape=jax.ShapeDtypeStruct((1, pb), jnp.float32),
        grid=(pb // tb,),
        in_specs=[
            stream(1),                   # user indices  (1, PB) int32
            stream(1),                   # item indices  (1, PB) int32
            const((feat, nu)),           # user table    [mf+half, NU_pad] bf16
            const((feat, ni)),           # item table    [mf+half, NI_pad] bf16
            const((hidden, half)),       # w1_u
            const((hidden, half)),       # w1_i
            const((hidden, 1)),          # b1
            const((1, mf_dim)),          # w2_gmf
            const((1, hidden)),          # w2_mlp
            pl.BlockSpec(memory_space=pltpu.MemorySpace.SMEM),  # b2 scalar
        ],
        out_specs=pl.BlockSpec((1, tb), lambda i: (0, i)),
        compiler_params=pltpu.CompilerParams(
            dimension_semantics=("parallel",),
            vmem_limit_bytes=_vmem_limit_bytes(tb, nu, ni,
                                               user_tab.dtype.itemsize),
        ),
    )(user_idx, item_idx, user_tab, item_tab,
      w1_u, w1_i, b1, w2_gmf, w2_mlp, b2)


# ------------------------------- model glue ------------------------------- #
def init_neumf_params(key, num_users, num_items, mf_dim=8, mlp_layers=(16, 8),
                      table_dtype=jnp.bfloat16):
    half = mlp_layers[0] // 2
    hidden = mlp_layers[1]
    ks = jax.random.split(key, 8)
    nu_pad = _round_up(num_users, 128)
    ni_pad = _round_up(num_items, 128)

    def table(k, feat, n, n_pad):
        t = 0.01 * jax.random.normal(k, (feat, n), jnp.float32)
        t = jnp.pad(t, ((0, 0), (0, n_pad - n)))     # pad columns with zeros
        return t.astype(table_dtype)

    user_gmf = table(ks[0], mf_dim, num_users, nu_pad)
    item_gmf = table(ks[1], mf_dim, num_items, ni_pad)
    user_mlp = table(ks[2], half, num_users, nu_pad)
    item_mlp = table(ks[3], half, num_items, ni_pad)
    return {
        # Combined feature-major tables: rows [0:mf_dim]=GMF emb, [mf_dim:]=MLP emb.
        "user_tab": jnp.concatenate([user_gmf, user_mlp], axis=0),
        "item_tab": jnp.concatenate([item_gmf, item_mlp], axis=0),
        # MLP Linear(16 -> 8), PyTorch layout [out, in].
        "w1": 0.1 * jax.random.normal(ks[4], (hidden, mlp_layers[0]), jnp.float32),
        "b1": 0.1 * jax.random.normal(ks[5], (hidden,), jnp.float32),
        # Predict Linear(mf_dim + hidden -> 1), PyTorch layout [out, in].
        "w2": 0.1 * jax.random.normal(ks[6], (1, mf_dim + hidden), jnp.float32),
        "b2": 0.1 * jax.random.normal(ks[7], (1,), jnp.float32),
    }


def neumf_forward(params, user, item, max_tb=8192):
    B = user.shape[0]
    hidden = params["w1"].shape[0]
    half = params["w1"].shape[1] // 2
    mf_dim = params["w2"].shape[1] - hidden

    tb = _choose_tb(B, max_tb)
    pb = _round_up(B, tb)
    pad = pb - B
    # Pad with index 0 (valid row); pad lanes are sliced off below.
    user_p = jnp.pad(user.astype(jnp.int32), (0, pad)).reshape(1, pb)
    item_p = jnp.pad(item.astype(jnp.int32), (0, pad)).reshape(1, pb)

    # Split weights so no concat is ever materialized.
    w1_u = params["w1"][:, :half]             # [hidden, half]
    w1_i = params["w1"][:, half:]             # [hidden, half]
    b1 = params["b1"].reshape(hidden, 1)      # [hidden, 1]
    w2_gmf = params["w2"][:, :mf_dim]         # [1, mf_dim]
    w2_mlp = params["w2"][:, mf_dim:]         # [1, hidden]
    b2 = params["b2"].reshape(1)              # SMEM scalar

    out = neumf_predict_pallas(user_p, item_p,
                               params["user_tab"], params["item_tab"],
                               w1_u, w1_i, b1, w2_gmf, w2_mlp, b2, tb=tb)
    return out[0, :B]                         # matches pred.squeeze() -> [B]


def neumf_reference(params, user, item):
    hidden = params["w1"].shape[0]
    mf_dim = params["w2"].shape[1] - hidden
    u = params["user_tab"][:, user].astype(jnp.float32)   # [mf+half, B]
    i = params["item_tab"][:, item].astype(jnp.float32)
    gmf_out = (u[:mf_dim] * i[:mf_dim]).T                 # [B, mf_dim]
    mlp_cat = jnp.concatenate([u[mf_dim:].T, i[mf_dim:].T], axis=-1)  # [B, 16]
    mlp_out = jnp.maximum(mlp_cat @ params["w1"].T + params["b1"], 0.0)
    cat_out = jnp.concatenate([gmf_out, mlp_out], axis=-1)
    pred = cat_out @ params["w2"].T + params["b2"]
    return jnp.squeeze(pred, axis=-1)


if __name__ == "__main__":
    key = jax.random.PRNGKey(0)
    num_users, num_items = 32, 48
    batch = 200   # pads to 256; _choose_tb picks tb=128 -> 2-step parallel grid

    params = init_neumf_params(key, num_users, num_items)

    k_u, k_i = jax.random.split(jax.random.PRNGKey(1))
    user = jax.random.randint(k_u, (batch,), 0, num_users, dtype=jnp.int32)
    item = jax.random.randint(k_i, (batch,), 0, num_items, dtype=jnp.int32)

    out = jax.block_until_ready(neumf_forward(params, user, item))
    ref = jax.block_until_ready(neumf_reference(params, user, item))

    assert out.shape == (batch,), out.shape
    assert jnp.allclose(out, ref, atol=2e-5, rtol=2e-5), (out, ref)
    print("KERNEL_OK")
</pallas_src>

<mosaic_0001>
module attributes {stable_mosaic.version = 11 : i64} {
  func.func @neumf_kernel(%arg0: i32, %arg1: memref<1x128xi32, #tpu.memory_space<vmem>>, %arg2: memref<1x128xi32, #tpu.memory_space<vmem>>, %arg3: memref<16x128xbf16, #tpu.memory_space<vmem>>, %arg4: memref<16x128xbf16, #tpu.memory_space<vmem>>, %arg5: memref<8x8xf32, #tpu.memory_space<vmem>>, %arg6: memref<8x8xf32, #tpu.memory_space<vmem>>, %arg7: memref<8x1xf32, #tpu.memory_space<vmem>>, %arg8: memref<1x8xf32, #tpu.memory_space<vmem>>, %arg9: memref<1x8xf32, #tpu.memory_space<vmem>>, %arg10: memref<1xf32, #tpu.memory_space<smem>>, %arg11: memref<1x128xf32, #tpu.memory_space<vmem>>) attributes {dimension_semantics = [#tpu.dimension_semantics<parallel>], iteration_bounds = array<i64: 2>, scalar_prefetch = 0 : i64, scratch_operands = 0 : i64, tpu.core_type = #tpu.core_type<tc>, window_params = [{transform_indices = @transform_0, window_bounds = array<i64: 1, 128>}, {transform_indices = @transform_1, window_bounds = array<i64: 1, 128>}, {pipeline_mode = #tpu.pipeline_mode<synchronous>, transform_indices = @transform_2, window_bounds = array<i64: 16, 128>}, {pipeline_mode = #tpu.pipeline_mode<synchronous>, transform_indices = @transform_3, window_bounds = array<i64: 16, 128>}, {pipeline_mode = #tpu.pipeline_mode<synchronous>, transform_indices = @transform_4, window_bounds = array<i64: 8, 8>}, {pipeline_mode = #tpu.pipeline_mode<synchronous>, transform_indices = @transform_5, window_bounds = array<i64: 8, 8>}, {pipeline_mode = #tpu.pipeline_mode<synchronous>, transform_indices = @transform_6, window_bounds = array<i64: 8, 1>}, {pipeline_mode = #tpu.pipeline_mode<synchronous>, transform_indices = @transform_7, window_bounds = array<i64: 1, 8>}, {pipeline_mode = #tpu.pipeline_mode<synchronous>, transform_indices = @transform_8, window_bounds = array<i64: 1, 8>}, {transform_indices = @transform_9, window_bounds = array<i64: 1>}, {transform_indices = @transform_10, window_bounds = array<i64: 1, 128>}]} {
    %c0 = arith.constant 0 : index
    %c0_0 = arith.constant 0 : index
    %0 = vector.load %arg3[%c0, %c0_0] : memref<16x128xbf16, #tpu.memory_space<vmem>>, vector<16x128xbf16>
    %c0_1 = arith.constant 0 : index
    %c0_2 = arith.constant 0 : index
    %1 = vector.load %arg4[%c0_1, %c0_2] : memref<16x128xbf16, #tpu.memory_space<vmem>>, vector<16x128xbf16>
    %c0_3 = arith.constant 0 : index
    %c0_4 = arith.constant 0 : index
    %2 = vector.load %arg1[%c0_3, %c0_4] : memref<1x128xi32, #tpu.memory_space<vmem>>, vector<1x128xi32>
    %c0_5 = arith.constant 0 : index
    %c0_6 = arith.constant 0 : index
    %3 = vector.load %arg2[%c0_5, %c0_6] : memref<1x128xi32, #tpu.memory_space<vmem>>, vector<1x128xi32>
    %4 = tpu.iota {dimensions = array<i32: 0>} : vector<128x128xi32>
    %5 = vector.broadcast %2 : vector<1x128xi32> to vector<128x128xi32>
    %6 = arith.cmpi eq, %4, %5 : vector<128x128xi32>
    %cst = arith.constant 1.000000e+00 : f32
    %cst_7 = arith.constant 0.000000e+00 : f32
    %7 = vector.broadcast %cst : f32 to vector<128x128xf32>
    %8 = vector.broadcast %cst_7 : f32 to vector<128x128xf32>
    %9 = arith.select %6, %7, %8 : vector<128x128xi1>, vector<128x128xf32>
    %10 = arith.truncf %9 : vector<128x128xf32> to vector<128x128xbf16>
    %11 = tpu.iota {dimensions = array<i32: 0>} : vector<128x128xi32>
    %12 = vector.broadcast %3 : vector<1x128xi32> to vector<128x128xi32>
    %13 = arith.cmpi eq, %11, %12 : vector<128x128xi32>
    %cst_8 = arith.constant 1.000000e+00 : f32
    %cst_9 = arith.constant 0.000000e+00 : f32
    %14 = vector.broadcast %cst_8 : f32 to vector<128x128xf32>
    %15 = vector.broadcast %cst_9 : f32 to vector<128x128xf32>
    %16 = arith.select %13, %14, %15 : vector<128x128xi1>, vector<128x128xf32>
    %17 = arith.truncf %16 : vector<128x128xf32> to vector<128x128xbf16>
    %cst_10 = arith.constant dense<0.000000e+00> : vector<16x128xf32>
    %18 = tpu.matmul %0, %10, %cst_10 {dimension_numbers = #tpu.dot_dimension_numbers<[1], [0], [0], [1], [0, 0, 1, 1], [], []>} : vector<16x128xbf16>, vector<128x128xbf16>, vector<16x128xf32> -> vector<16x128xf32>
    %cst_11 = arith.constant dense<0.000000e+00> : vector<16x128xf32>
    %19 = tpu.matmul %1, %17, %cst_11 {dimension_numbers = #tpu.dot_dimension_numbers<[1], [0], [0], [1], [0, 0, 1, 1], [], []>} : vector<16x128xbf16>, vector<128x128xbf16>, vector<16x128xf32> -> vector<16x128xf32>
    %20 = vector.extract_strided_slice %18 {offsets = [0, 0], sizes = [8, 128], strides = [1, 1]} : vector<16x128xf32> to vector<8x128xf32>
    %21 = vector.extract_strided_slice %19 {offsets = [0, 0], sizes = [8, 128], strides = [1, 1]} : vector<16x128xf32> to vector<8x128xf32>
    %22 = arith.mulf %20, %21 : vector<8x128xf32>
    %c0_12 = arith.constant 0 : index
    %c0_13 = arith.constant 0 : index
    %23 = vector.load %arg5[%c0_12, %c0_13] : memref<8x8xf32, #tpu.memory_space<vmem>>, vector<8x8xf32>
    %24 = vector.extract_strided_slice %18 {offsets = [8, 0], sizes = [8, 128], strides = [1, 1]} : vector<16x128xf32> to vector<8x128xf32>
    %cst_14 = arith.constant dense<0.000000e+00> : vector<8x128xf32>
    %25 = tpu.matmul %23, %24, %cst_14 {dimension_numbers = #tpu.dot_dimension_numbers<[1], [0], [0], [1], [0, 0, 1, 1], [], []>} : vector<8x8xf32>, vector<8x128xf32>, vector<8x128xf32> -> vector<8x128xf32>
    %c0_15 = arith.constant 0 : index
    %c0_16 = arith.constant 0 : index
    %26 = vector.load %arg6[%c0_15, %c0_16] : memref<8x8xf32, #tpu.memory_space<vmem>>, vector<8x8xf32>
    %27 = vector.extract_strided_slice %19 {offsets = [8, 0], sizes = [8, 128], strides = [1, 1]} : vector<16x128xf32> to vector<8x128xf32>
    %cst_17 = arith.constant dense<0.000000e+00> : vector<8x128xf32>
    %28 = tpu.matmul %26, %27, %cst_17 {dimension_numbers = #tpu.dot_dimension_numbers<[1], [0], [0], [1], [0, 0, 1, 1], [], []>} : vector<8x8xf32>, vector<8x128xf32>, vector<8x128xf32> -> vector<8x128xf32>
    %29 = arith.addf %25, %28 : vector<8x128xf32>
    %c0_18 = arith.constant 0 : index
    %c0_19 = arith.constant 0 : index
    %30 = vector.load %arg7[%c0_18, %c0_19] : memref<8x1xf32, #tpu.memory_space<vmem>>, vector<8x1xf32>
    %31 = vector.broadcast %30 : vector<8x1xf32> to vector<8x128xf32>
    %32 = arith.addf %29, %31 : vector<8x128xf32>
    %cst_20 = arith.constant 0.000000e+00 : f32
    %33 = vector.broadcast %cst_20 : f32 to vector<8x128xf32>
    %34 = arith.maximumf %32, %33 : vector<8x128xf32>
    %c0_21 = arith.constant 0 : index
    %c0_22 = arith.constant 0 : index
    %35 = vector.load %arg8[%c0_21, %c0_22] : memref<1x8xf32, #tpu.memory_space<vmem>>, vector<1x8xf32>
    %cst_23 = arith.constant dense<0.000000e+00> : vector<1x128xf32>
    %36 = tpu.matmul %35, %22, %cst_23 {dimension_numbers = #tpu.dot_dimension_numbers<[1], [0], [0], [1], [0, 0, 1, 1], [], []>} : vector<1x8xf32>, vector<8x128xf32>, vector<1x128xf32> -> vector<1x128xf32>
    %c0_24 = arith.constant 0 : index
    %c0_25 = arith.constant 0 : index
    %37 = vector.load %arg9[%c0_24, %c0_25] : memref<1x8xf32, #tpu.memory_space<vmem>>, vector<1x8xf32>
    %cst_26 = arith.constant dense<0.000000e+00> : vector<1x128xf32>
    %38 = tpu.matmul %37, %34, %cst_26 {dimension_numbers = #tpu.dot_dimension_numbers<[1], [0], [0], [1], [0, 0, 1, 1], [], []>} : vector<1x8xf32>, vector<8x128xf32>, vector<1x128xf32> -> vector<1x128xf32>
    %39 = arith.addf %36, %38 : vector<1x128xf32>
    %c0_27 = arith.constant 0 : index
    %40 = memref.load %arg10[%c0_27] : memref<1xf32, #tpu.memory_space<smem>>
    %41 = vector.broadcast %40 : f32 to vector<1x128xf32>
    %42 = arith.addf %39, %41 : vector<1x128xf32>
    %c0_28 = arith.constant 0 : index
    %c0_29 = arith.constant 0 : index
    %43 = vector.load %arg11[%c0_28, %c0_29] : memref<1x128xf32, #tpu.memory_space<vmem>>, vector<1x128xf32>
    tpu.vector_store %arg11[%c0_28, %c0_29], %42 {strides = array<i32>} : memref<1x128xf32, #tpu.memory_space<vmem>>, vector<1x128xf32>,
    return
  }
  func.func @transform_0(%arg0: i32) -> (i32, i32) {
    %c0_i32 = arith.constant 0 : i32
    %c0_i32_0 = arith.constant 0 : i32
    return %c0_i32, %arg0 : i32, i32
  }
  func.func @transform_1(%arg0: i32) -> (i32, i32) {
    %c0_i32 = arith.constant 0 : i32
    %c0_i32_0 = arith.constant 0 : i32
    return %c0_i32, %arg0 : i32, i32
  }
  func.func @transform_2(%arg0: i32) -> (i32, i32) {
    %c0_i32 = arith.constant 0 : i32
    %c0_i32_0 = arith.constant 0 : i32
    %c0_i32_1 = arith.constant 0 : i32
    return %c0_i32, %c0_i32_0 : i32, i32
  }
  func.func @transform_3(%arg0: i32) -> (i32, i32) {
    %c0_i32 = arith.constant 0 : i32
    %c0_i32_0 = arith.constant 0 : i32
    %c0_i32_1 = arith.constant 0 : i32
    return %c0_i32, %c0_i32_0 : i32, i32
  }
  func.func @transform_4(%arg0: i32) -> (i32, i32) {
    %c0_i32 = arith.constant 0 : i32
    %c0_i32_0 = arith.constant 0 : i32
    %c0_i32_1 = arith.constant 0 : i32
    return %c0_i32, %c0_i32_0 : i32, i32
  }
  func.func @transform_5(%arg0: i32) -> (i32, i32) {
    %c0_i32 = arith.constant 0 : i32
    %c0_i32_0 = arith.constant 0 : i32
    %c0_i32_1 = arith.constant 0 : i32
    return %c0_i32, %c0_i32_0 : i32, i32
  }
  func.func @transform_6(%arg0: i32) -> (i32, i32) {
    %c0_i32 = arith.constant 0 : i32
    %c0_i32_0 = arith.constant 0 : i32
    %c0_i32_1 = arith.constant 0 : i32
    return %c0_i32, %c0_i32_0 : i32, i32
  }
  func.func @transform_7(%arg0: i32) -> (i32, i32) {
    %c0_i32 = arith.constant 0 : i32
    %c0_i32_0 = arith.constant 0 : i32
    %c0_i32_1 = arith.constant 0 : i32
    return %c0_i32, %c0_i32_0 : i32, i32
  }
  func.func @transform_8(%arg0: i32) -> (i32, i32) {
    %c0_i32 = arith.constant 0 : i32
    %c0_i32_0 = arith.constant 0 : i32
    %c0_i32_1 = arith.constant 0 : i32
    return %c0_i32, %c0_i32_0 : i32, i32
  }
  func.func @transform_9(%arg0: i32) -> i32 {
    %c0_i32 = arith.constant 0 : i32
    %c0_i32_0 = arith.constant 0 : i32
    return %c0_i32 : i32
  }
  func.func @transform_10(%arg0: i32) -> (i32, i32) {
    %c0_i32 = arith.constant 0 : i32
    %c0_i32_0 = arith.constant 0 : i32
    return %c0_i32, %arg0 : i32, i32
  }
}

</mosaic_0001>

<llo_original>
// kernel: tpu_custom_call.1
$region0: #{tpu_custom_call.1}
  #allocation0 [shape = 'u32[]', space=smem, size = 0x4, offset = 0x4, fixed_abs, tag = 'smem constant byte address 0x4 - core index']
  #allocation1 [shape = 'u32[144,128]{1,0:T(1,128)}', space=vmem, size = 0x12000, scoped, tag = 'internal scratch']
  #allocation2 [shape = 'f32[1]{0:T(128)S(6)}', space=smem, size = 0x200, scoped, tag = 'scoped memory for tpu_custom_call.1']
  %s0 = inlined_call_operand.hbm [shape: s32[1,256], index: 0, kind: input, shape index: {}]
  %s1 = inlined_call_operand.hbm [shape: s32[1,256], index: 1, kind: input, shape index: {}]
  %s2 = inlined_call_operand.vmem [shape: bf16[16,128], index: 2, kind: input, shape index: {}]
  %s3 = inlined_call_operand.vmem [shape: bf16[16,128], index: 3, kind: input, shape index: {}]
  %s4 = inlined_call_operand.vmem [shape: f32[8,8], index: 4, kind: input, shape index: {}]
  %s5 = inlined_call_operand.hbm [shape: f32[8,8], index: 5, kind: input, shape index: {}]
  %s6 = inlined_call_operand.vmem [shape: f32[8,1], index: 6, kind: input, shape index: {}]
  %s7 = inlined_call_operand.vmem [shape: f32[1,8], index: 7, kind: input, shape index: {}]
  %s8 = inlined_call_operand.vmem [shape: f32[1,8], index: 8, kind: input, shape index: {}]
  %s9 = inlined_call_operand.<no memory space> [shape: f32[1], index: 9, kind: input, shape index: {}]
  %s10 = inlined_call_operand.hbm [shape: f32[1,256], index: 10, kind: output, shape index: {}]
  %s11 = sld [smem:[#allocation0]]
  $region85: #{tpu_custom_call.1} parent=0
    _
  %s13 = ssub.s32 1, %s11
  %s14 = scalar_select 0, %s13, %s11
  %15 = sst [smem:[#allocation2]] %s9
  $region1: #{tpu_custom_call.1} parent=0
    #allocation3 [shape = 'u8[1024]{0}', space=vmem, size = 0x400, scoped, tag = 'input window, operand 0']
    #allocation4 [shape = 's32[2]{0}', space=sflag, size = 0x8, scoped, tag = 'scoped memory for tpu_custom_call.1']
    #allocation5 [shape = 's32[2]{0}', space=sflag, size = 0x8, scoped, tag = 'scoped memory for tpu_custom_call.1']
    #allocation6 [shape = 'u8[1024]{0}', space=vmem, size = 0x400, scoped, tag = 'input window, operand 1']
    #allocation7 [shape = 's32[2]{0}', space=sflag, size = 0x8, scoped, tag = 'scoped memory for tpu_custom_call.1']
    #allocation8 [shape = 'u8[4096]{0}', space=vmem, size = 0x1000, scoped, tag = 'input window, operand 5, single buffered']
    #allocation9 [shape = 'u8[1024]{0}', space=vmem, size = 0x400, scoped, tag = 'output window, operand 0']
    %16 = vsyncpa [#allocation4], 0
    %s17 = scalar_lea.sflag [#allocation4], 1
    %18 = vsyncpa %s17, 0
    %19 = vsyncpa [#allocation7], 0
    %s20 = scalar_lea.sflag [#allocation7], 1
    %21 = vsyncpa %s20, 0
    %22 = vsyncpa [#allocation5], 0
    %s23 = scalar_lea.sflag [#allocation5], 1
    %24 = vsyncpa %s23, 0
    loop: start=0, step=1, limit=4
    $region2: #{tpu_custom_call.1} parent=1 // loop_pre_header
      _
    $region3: #{tpu_custom_call.1} parent=1 // loop_header
      %s26 = sphi 0, %s30
      %p27 = scmp.ge.s32.totalorder %s26, 4
      %s36 = sphi 0, %s38
      %s39 = sphi 0, %s36
      %s40 = sphi 0, %s39
      %s56 = sphi 0, %s40
      %s62 = sphi 0, %s64
      %s65 = sphi 0, %s62
      %s66 = sphi 0, %s65
      %s82 = sphi 0, %s66
      %s86 = sphi 0, %s86
      %s88 = sphi 0, %s86
      %s89 = sphi 0, %s88
      %s103 = sphi 0, %s89
      %s107 = sphi 0, %s107
      %s109 = sphi 0, %s107
      %s110 = sphi 0, %s109
      %s124 = sphi 0, %s110
      %s128 = sphi 0, %s128
      %s130 = sphi 0, %s128
      %s131 = sphi 0, %s130
      %s145 = sphi 0, %s131
      %s149 = sphi 0, %s149
      %s151 = sphi 0, %s149
      %s152 = sphi 0, %s151
      %s166 = sphi 0, %s152
      %s170 = sphi 0, %s170
      %s172 = sphi 0, %s170
      %s173 = sphi 0, %s172
      %s187 = sphi 0, %s173
      %s191 = sphi 0, %s191
      %s193 = sphi 0, %s191
      %s194 = sphi 0, %s193
      %s208 = sphi 0, %s194
      %s212 = sphi 0, %s212
      %s214 = sphi 0, %s212
      %s215 = sphi 0, %s214
      %s229 = sphi 0, %s215
      %s233 = sphi 0, %s233
      %s235 = sphi 0, %s233
      %s236 = sphi 0, %s235
      %s250 = sphi 0, %s236
      %s256 = sphi 0, %s258
      %s259 = sphi 0, %s256
      %s260 = sphi 0, %s259
      %s276 = sphi 0, %s260
    $region4: #{tpu_custom_call.1} parent=1 // loop_header_branch
      %29 = sbr.rel (%p27) target = $region8
    $region5: #{tpu_custom_call.1} parent=1 // loop_body
      %s31 = ssub.s32 %s26, 1
      %s32 = ssub.s32 %s26, 2
      %s33 = sadd.s32 %s26, 1
      %s34 = ssub.s32 %s26, %s33
      %p35 = scmp.eq.s32.totalorder %s34, 0
      %s37 = sadd.s32 %s36, 1
      %s38 = scalar_select %p35, %s36, %s37
      %p41 = pneg %p35
      %p42 = scmp.eq.s32.totalorder %s26, 1
      %p43 = por %p41, %p42
      %p44 = scmp.ne.s32.totalorder %s36, %s39
      %p45 = scmp.eq.s32.totalorder %s26, 0
      %p46 = por %p44, %p45
      %p47 = scmp.ne.s32.totalorder %s36, %s39
      %p48 = scmp.eq.s32.totalorder %s31, 1
      %p49 = por %p47, %p48
      %p50 = scmp.ne.s32.totalorder %s39, %s40
      %p51 = scmp.eq.s32.totalorder %s31, 0
      %p52 = por %p50, %p51
      %p53 = scmp.ne.s32.totalorder %s39, %s40
      %p54 = scmp.eq.s32.totalorder %s32, 1
      %p55 = por %p53, %p54
      %p57 = scmp.ne.s32.totalorder %s40, %s56
      %p58 = scmp.eq.s32.totalorder %s32, 0
      %p59 = por %p57, %p58
      %s60 = ssub.s32 %s26, %s33
      %p61 = scmp.eq.s32.totalorder %s60, 0
      %s63 = sadd.s32 %s62, 1
      %s64 = scalar_select %p61, %s62, %s63
      %p67 = pneg %p61
      %p68 = scmp.eq.s32.totalorder %s26, 1
      %p69 = por %p67, %p68
      %p70 = scmp.ne.s32.totalorder %s62, %s65
      %p71 = scmp.eq.s32.totalorder %s26, 0
      %p72 = por %p70, %p71
      %p73 = scmp.ne.s32.totalorder %s62, %s65
      %p74 = scmp.eq.s32.totalorder %s31, 1
      %p75 = por %p73, %p74
      %p76 = scmp.ne.s32.totalorder %s65, %s66
      %p77 = scmp.eq.s32.totalorder %s31, 0
      %p78 = por %p76, %p77
      %p79 = scmp.ne.s32.totalorder %s65, %s66
      %p80 = scmp.eq.s32.totalorder %s32, 1
      %p81 = por %p79, %p80
      %p83 = scmp.ne.s32.totalorder %s66, %s82
      %p84 = scmp.eq.s32.totalorder %s32, 0
      %p85 = por %p83, %p84
      %s87 = sadd.s32 %s86, 1
      %p90 = scmp.eq.s32.totalorder %s26, 1
      %p91 = scmp.ne.s32.totalorder %s86, %s88
      %p92 = scmp.eq.s32.totalorder %s26, 0
      %p93 = por %p91, %p92
      %p94 = scmp.ne.s32.totalorder %s86, %s88
      %p95 = scmp.eq.s32.totalorder %s31, 1
      %p96 = por %p94, %p95
      %p97 = scmp.ne.s32.totalorder %s88, %s89
      %p98 = scmp.eq.s32.totalorder %s31, 0
      %p99 = por %p97, %p98
      %p100 = scmp.ne.s32.totalorder %s88, %s89
      %p101 = scmp.eq.s32.totalorder %s32, 1
      %p102 = por %p100, %p101
      %p104 = scmp.ne.s32.totalorder %s89, %s103
      %p105 = scmp.eq.s32.totalorder %s32, 0
      %p106 = por %p104, %p105
      %s108 = sadd.s32 %s107, 1
      %p111 = scmp.eq.s32.totalorder %s26, 1
      %p112 = scmp.ne.s32.totalorder %s107, %s109
      %p113 = scmp.eq.s32.totalorder %s26, 0
      %p114 = por %p112, %p113
      %p115 = scmp.ne.s32.totalorder %s107, %s109
      %p116 = scmp.eq.s32.totalorder %s31, 1
      %p117 = por %p115, %p116
      %p118 = scmp.ne.s32.totalorder %s109, %s110
      %p119 = scmp.eq.s32.totalorder %s31, 0
      %p120 = por %p118, %p119
      %p121 = scmp.ne.s32.totalorder %s109, %s110
      %p122 = scmp.eq.s32.totalorder %s32, 1
      %p123 = por %p121, %p122
      %p125 = scmp.ne.s32.totalorder %s110, %s124
      %p126 = scmp.eq.s32.totalorder %s32, 0
      %p127 = por %p125, %p126
      %s129 = sadd.s32 %s128, 1
      %p132 = scmp.eq.s32.totalorder %s26, 1
      %p133 = scmp.ne.s32.totalorder %s128, %s130
      %p134 = scmp.eq.s32.totalorder %s26, 0
      %p135 = por %p133, %p134
      %p136 = scmp.ne.s32.totalorder %s128, %s130
      %p137 = scmp.eq.s32.totalorder %s31, 1
      %p138 = por %p136, %p137
      %p139 = scmp.ne.s32.totalorder %s130, %s131
      %p140 = scmp.eq.s32.totalorder %s31, 0
      %p141 = por %p139, %p140
      %p142 = scmp.ne.s32.totalorder %s130, %s131
      %p143 = scmp.eq.s32.totalorder %s32, 1
      %p144 = por %p142, %p143
      %p146 = scmp.ne.s32.totalorder %s131, %s145
      %p147 = scmp.eq.s32.totalorder %s32, 0
      %p148 = por %p146, %p147
      %s150 = sadd.s32 %s149, 1
      %p153 = scmp.eq.s32.totalorder %s26, 1
      %p154 = scmp.ne.s32.totalorder %s149, %s151
      %p155 = scmp.eq.s32.totalorder %s26, 0
      %p156 = por %p154, %p155
      %p157 = scmp.ne.s32.totalorder %s149, %s151
      %p158 = scmp.eq.s32.totalorder %s31, 1
      %p159 = por %p157, %p158
      %p160 = scmp.ne.s32.totalorder %s151, %s152
      %p161 = scmp.eq.s32.totalorder %s31, 0
      %p162 = por %p160, %p161
      %p163 = scmp.ne.s32.totalorder %s151, %s152
      %p164 = scmp.eq.s32.totalorder %s32, 1
      %p165 = por %p163, %p164
      %p167 = scmp.ne.s32.totalorder %s152, %s166
      %p168 = scmp.eq.s32.totalorder %s32, 0
      %p169 = por %p167, %p168
      %s171 = sadd.s32 %s170, 1
      %p174 = scmp.eq.s32.totalorder %s26, 1
      %p175 = scmp.ne.s32.totalorder %s170, %s172
      %p176 = scmp.eq.s32.totalorder %s26, 0
      %p177 = por %p175, %p176
      %p178 = scmp.ne.s32.totalorder %s170, %s172
      %p179 = scmp.eq.s32.totalorder %s31, 1
      %p180 = por %p178, %p179
      %p181 = scmp.ne.s32.totalorder %s172, %s173
      %p182 = scmp.eq.s32.totalorder %s31, 0
      %p183 = por %p181, %p182
      %p184 = scmp.ne.s32.totalorder %s172, %s173
      %p185 = scmp.eq.s32.totalorder %s32, 1
      %p186 = por %p184, %p185
      %p188 = scmp.ne.s32.totalorder %s173, %s187
      %p189 = scmp.eq.s32.totalorder %s32, 0
      %p190 = por %p188, %p189
      %s192 = sadd.s32 %s191, 1
      %p195 = scmp.eq.s32.totalorder %s26, 1
      %p196 = scmp.ne.s32.totalorder %s191, %s193
      %p197 = scmp.eq.s32.totalorder %s26, 0
      %p198 = por %p196, %p197
      %p199 = scmp.ne.s32.totalorder %s191, %s193
      %p200 = scmp.eq.s32.totalorder %s31, 1
      %p201 = por %p199, %p200
      %p202 = scmp.ne.s32.totalorder %s193, %s194
      %p203 = scmp.eq.s32.totalorder %s31, 0
      %p204 = por %p202, %p203
      %p205 = scmp.ne.s32.totalorder %s193, %s194
      %p206 = scmp.eq.s32.totalorder %s32, 1
      %p207 = por %p205, %p206
      %p209 = scmp.ne.s32.totalorder %s194, %s208
      %p210 = scmp.eq.s32.totalorder %s32, 0
      %p211 = por %p209, %p210
      %s213 = sadd.s32 %s212, 1
      %p216 = scmp.eq.s32.totalorder %s26, 1
      %p217 = scmp.ne.s32.totalorder %s212, %s214
      %p218 = scmp.eq.s32.totalorder %s26, 0
      %p219 = por %p217, %p218
      %p220 = scmp.ne.s32.totalorder %s212, %s214
      %p221 = scmp.eq.s32.totalorder %s31, 1
      %p222 = por %p220, %p221
      %p223 = scmp.ne.s32.totalorder %s214, %s215
      %p224 = scmp.eq.s32.totalorder %s31, 0
      %p225 = por %p223, %p224
      %p226 = scmp.ne.s32.totalorder %s214, %s215
      %p227 = scmp.eq.s32.totalorder %s32, 1
      %p228 = por %p226, %p227
      %p230 = scmp.ne.s32.totalorder %s215, %s229
      %p231 = scmp.eq.s32.totalorder %s32, 0
      %p232 = por %p230, %p231
      %s234 = sadd.s32 %s233, 1
      %p237 = scmp.eq.s32.totalorder %s26, 1
      %p238 = scmp.ne.s32.totalorder %s233, %s235
      %p239 = scmp.eq.s32.totalorder %s26, 0
      %p240 = por %p238, %p239
      %p241 = scmp.ne.s32.totalorder %s233, %s235
      %p242 = scmp.eq.s32.totalorder %s31, 1
      %p243 = por %p241, %p242
      %p244 = scmp.ne.s32.totalorder %s235, %s236
      %p245 = scmp.eq.s32.totalorder %s31, 0
      %p246 = por %p244, %p245
      %p247 = scmp.ne.s32.totalorder %s235, %s236
      %p248 = scmp.eq.s32.totalorder %s32, 1
      %p249 = por %p247, %p248
      %p251 = scmp.ne.s32.totalorder %s236, %s250
      %p252 = scmp.eq.s32.totalorder %s32, 0
      %p253 = por %p251, %p252
      %s254 = ssub.s32 %s26, %s33
      %p255 = scmp.eq.s32.totalorder %s254, 0
      %s257 = sadd.s32 %s256, 1
      %s258 = scalar_select %p255, %s256, %s257
      %p261 = pneg %p255
      %p262 = scmp.eq.s32.totalorder %s26, 1
      %p263 = por %p261, %p262
      %p264 = scmp.ne.s32.totalorder %s256, %s259
      %p265 = scmp.eq.s32.totalorder %s26, 0
      %p266 = por %p264, %p265
      %p267 = scmp.ne.s32.totalorder %s256, %s259
      %p268 = scmp.eq.s32.totalorder %s31, 1
      %p269 = por %p267, %p268
      %p270 = scmp.ne.s32.totalorder %s259, %s260
      %p271 = scmp.eq.s32.totalorder %s31, 0
      %p272 = por %p270, %p271
      %p273 = scmp.ne.s32.totalorder %s259, %s260
      %p274 = scmp.eq.s32.totalorder %s32, 1
      %p275 = por %p273, %p274
      %p277 = scmp.ne.s32.totalorder %s260, %s276
      %p278 = scmp.eq.s32.totalorder %s32, 0
      %p279 = por %p277, %p278
      %p280 = scmp.le.s32.totalorder 1, %s26
      %p281 = scmp.lt.s32.totalorder %s26, 3
      %p282 = pnand %p280, %p281
      %p283 = pneg %p282
      // Predicated region
      $region9: #{tpu_custom_call.1} parent=5 // pred_check
        _
      $region10: #{tpu_custom_call.1} parent=5 // pred_check_branch
        %285 = sbr.rel (%p282) target = $region12
      $region11: #{tpu_custom_call.1} parent=5 // pred_region
        %s286 = ssub.s32 %s26, 1
        // Predicated region
        $region13: #{tpu_custom_call.1} parent=11 // pred_check
          %p287 = pneg %p99
        $region14: #{tpu_custom_call.1} parent=11 // pred_check_branch
          %289 = sbr.rel (%p287) target = $region16
        $region15: #{tpu_custom_call.1} parent=11 // pred_region
          _
        $region16: #{tpu_custom_call.1} parent=11 // pred_fallthru
          _
        // Predicated region
        $region17: #{tpu_custom_call.1} parent=11 // pred_check
          %p290 = pneg %p120
        $region18: #{tpu_custom_call.1} parent=11 // pred_check_branch
          %292 = sbr.rel (%p290) target = $region20
        $region19: #{tpu_custom_call.1} parent=11 // pred_region
          _
        $region20: #{tpu_custom_call.1} parent=11 // pred_fallthru
          _
        // Predicated region
        $region21: #{tpu_custom_call.1} parent=11 // pred_check
          %p293 = pneg %p141
        $region22: #{tpu_custom_call.1} parent=11 // pred_check_branch
          %295 = sbr.rel (%p293) target = $region24
        $region23: #{tpu_custom_call.1} parent=11 // pred_region
          _
        $region24: #{tpu_custom_call.1} parent=11 // pred_fallthru
          _
        // Predicated region
        $region25: #{tpu_custom_call.1} parent=11 // pred_check
          %p296 = pneg %p162
        $region26: #{tpu_custom_call.1} parent=11 // pred_check_branch
          %298 = sbr.rel (%p296) target = $region28
        $region27: #{tpu_custom_call.1} parent=11 // pred_region
          %s300 = ssub.s32 128, 128
          %301 = vsyncadd [#allocation7], %s300
          %s303 = sshll.u32 [#allocation8], 4
          %s304 = int_to_ptr.vmem [resolvable:$true] %s303
          %306 = dma.hbm_to_vmem [thread:$0]  %s5, 128, %s304, [#allocation7]
        $region28: #{tpu_custom_call.1} parent=11 // pred_fallthru
          _
        // Predicated region
        $region29: #{tpu_custom_call.1} parent=11 // pred_check
          %p307 = pneg %p183
        $region30: #{tpu_custom_call.1} parent=11 // pred_check_branch
          %309 = sbr.rel (%p307) target = $region32
        $region31: #{tpu_custom_call.1} parent=11 // pred_region
          _
        $region32: #{tpu_custom_call.1} parent=11 // pred_fallthru
          _
        // Predicated region
        $region33: #{tpu_custom_call.1} parent=11 // pred_check
          %p310 = pneg %p204
        $region34: #{tpu_custom_call.1} parent=11 // pred_check_branch
          %312 = sbr.rel (%p310) target = $region36
        $region35: #{tpu_custom_call.1} parent=11 // pred_region
          _
        $region36: #{tpu_custom_call.1} parent=11 // pred_fallthru
          _
        // Predicated region
        $region37: #{tpu_custom_call.1} parent=11 // pred_check
          %p313 = pneg %p225
        $region38: #{tpu_custom_call.1} parent=11 // pred_check_branch
          %315 = sbr.rel (%p313) target = $region40
        $region39: #{tpu_custom_call.1} parent=11 // pred_region
          _
        $region40: #{tpu_custom_call.1} parent=11 // pred_fallthru
          _
        // Predicated region
        $region41: #{tpu_custom_call.1} parent=11 // pred_check
          %p316 = pneg %p246
        $region42: #{tpu_custom_call.1} parent=11 // pred_check_branch
          %318 = sbr.rel (%p316) target = $region44
        $region43: #{tpu_custom_call.1} parent=11 // pred_region
          _
        $region44: #{tpu_custom_call.1} parent=11 // pred_fallthru
          _
      $region12: #{tpu_custom_call.1} parent=5 // pred_fallthru
        _
      %p319 = scmp.lt.s32.totalorder %s26, 2
      // Predicated region
      $region45: #{tpu_custom_call.1} parent=5 // pred_check
        %p320 = pneg %p319
      $region46: #{tpu_custom_call.1} parent=5 // pred_check_branch
        %322 = sbr.rel (%p320) target = $region48
      $region47: #{tpu_custom_call.1} parent=5 // pred_region
        // Predicated region
        $region49: #{tpu_custom_call.1} parent=47 // pred_check
          %p323 = pneg %p46
        $region50: #{tpu_custom_call.1} parent=47 // pred_check_branch
          %325 = sbr.rel (%p323) target = $region52
        $region51: #{tpu_custom_call.1} parent=47 // pred_region
          %s326 = sand.u32 %s36, 1
          %s327 = scalar_lea.sflag [#allocation4], %s326
          %s328 = sand.u32 %s36, 1
          %s329 = scalar_lea.vmem [#allocation3], %s328
          %s331 = ssub.s32 16, 16
          %332 = vsyncadd %s327, %s331
          %s333 = smul.addr %s26, 16
          %s334 = scalar_lea.hbm %s0, %s333
          %s336 = sshll.u32 %s329, 4
          %s337 = int_to_ptr.vmem [resolvable:$true] %s336
          %339 = dma.hbm_to_vmem [thread:$0]  %s334, 16, %s337, %s327
        $region52: #{tpu_custom_call.1} parent=47 // pred_fallthru
          _
        // Predicated region
        $region53: #{tpu_custom_call.1} parent=47 // pred_check
          %p340 = pneg %p72
        $region54: #{tpu_custom_call.1} parent=47 // pred_check_branch
          %342 = sbr.rel (%p340) target = $region56
        $region55: #{tpu_custom_call.1} parent=47 // pred_region
          %s343 = sand.u32 %s26, 1
          %s344 = scalar_lea.sflag [#allocation7], %s343
          %s345 = sand.u32 %s62, 1
          %s346 = scalar_lea.vmem [#allocation6], %s345
          %s348 = ssub.s32 16, 16
          %349 = vsyncadd %s344, %s348
          %s350 = smul.addr %s26, 16
          %s351 = scalar_lea.hbm %s1, %s350
          %s353 = sshll.u32 %s346, 4
          %s354 = int_to_ptr.vmem [resolvable:$true] %s353
          %356 = dma.hbm_to_vmem [thread:$0]  %s351, 16, %s354, %s344
        $region56: #{tpu_custom_call.1} parent=47 // pred_fallthru
          _
      $region48: #{tpu_custom_call.1} parent=5 // pred_fallthru
        _
      %p357 = scmp.le.s32.totalorder 1, %s26
      %p358 = scmp.lt.s32.totalorder %s26, 3
      %p359 = pnand %p357, %p358
      %p360 = pneg %p359
      // Predicated region
      $region57: #{tpu_custom_call.1} parent=5 // pred_check
        _
      $region58: #{tpu_custom_call.1} parent=5 // pred_check_branch
        %362 = sbr.rel (%p359) target = $region60
      $region59: #{tpu_custom_call.1} parent=5 // pred_region
        %s363 = ssub.s32 %s26, 1
        %s364 = sand.u32 %s39, 1
        %s365 = scalar_lea.sflag [#allocation4], %s364
        %s366 = sand.u32 %s39, 1
        %s367 = scalar_lea.vmem [#allocation3], %s366
        // Predicated region
        $region61: #{tpu_custom_call.1} parent=59 // pred_check
          %p368 = pneg %p52
        $region62: #{tpu_custom_call.1} parent=59 // pred_check_branch
          %370 = sbr.rel (%p368) target = $region64
        $region63: #{tpu_custom_call.1} parent=59 // pred_region
          %371 = dma.done %s365, 16
        $region64: #{tpu_custom_call.1} parent=59 // pred_fallthru
          _
        %s372 = sand.u32 %s31, 1
        %s373 = scalar_lea.sflag [#allocation7], %s372
        %s374 = sand.u32 %s65, 1
        %s375 = scalar_lea.vmem [#allocation6], %s374
        // Predicated region
        $region65: #{tpu_custom_call.1} parent=59 // pred_check
          %p376 = pneg %p78
        $region66: #{tpu_custom_call.1} parent=59 // pred_check_branch
          %378 = sbr.rel (%p376) target = $region68
        $region67: #{tpu_custom_call.1} parent=59 // pred_region
          %379 = dma.done %s373, 16
        $region68: #{tpu_custom_call.1} parent=59 // pred_fallthru
          _
        // Predicated region
        $region69: #{tpu_custom_call.1} parent=59 // pred_check
          %p380 = pneg %p162
        $region70: #{tpu_custom_call.1} parent=59 // pred_check_branch
          %382 = sbr.rel (%p380) target = $region72
        $region71: #{tpu_custom_call.1} parent=59 // pred_region
          %383 = dma.done [#allocation7], 128
        $region72: #{tpu_custom_call.1} parent=59 // pred_fallthru
          _
        %s384 = sand.u32 %s39, 1
        %s385 = scalar_lea.sflag [#allocation4], %s384
        %s386 = sand.u32 %s39, 1
        %s387 = scalar_lea.vmem [#allocation3], %s386
        %p388 = pneg %p52
        %p389 = pneg %p49
        %s390 = sand.u32 %s31, 1
        %s391 = scalar_lea.sflag [#allocation7], %s390
        %s392 = sand.u32 %s65, 1
        %s393 = scalar_lea.vmem [#allocation6], %s392
        %p394 = pneg %p78
        %p395 = pneg %p75
        %p396 = pneg %p99
        %p397 = pneg %p96
        %p398 = pneg %p120
        %p399 = pneg %p117
        %p400 = pneg %p141
        %p401 = pneg %p138
        %p402 = pneg %p162
        %p403 = pneg %p159
        %p404 = pneg %p183
        %p405 = pneg %p180
        %p406 = pneg %p204
        %p407 = pneg %p201
        %p408 = pneg %p225
        %p409 = pneg %p222
        %p410 = pneg %p246
        %p411 = pneg %p243
        %p412 = pneg %p272
        %p413 = pneg %p269
        %s414 = sand.u32 %s259, 1
        %s415 = scalar_lea.sflag [#allocation5], %s414
        %s416 = sand.u32 %s259, 1
        %s417 = scalar_lea.vmem [#allocation9], %s416
        %v419 = vld [vmem:[%s2] sm:$0xf]
        %v420 = vld [vmem:[%s2 + $0x4] sm:$0xf]
        %v421 = vld [vmem:[%s3] sm:$0xf]
        %v422 = vld [vmem:[%s3 + $0x4] sm:$0xf]
        %v423 = vld [vmem:[%s367] sm:$0x1]
        %v424 = vld [vmem:[%s375] sm:$0x1]
        %v425 = vlaneseq
        %v426 = vshrl.u32 %v425, 7
        %v427 = vadd.s32 %v426, 8
        %v428 = vadd.s32 %v426, 16
        %v429 = vadd.s32 %v426, 24
        %v430 = vadd.s32 %v426, 32
        %v431 = vadd.s32 %v426, 40
        %v432 = vadd.s32 %v426, 48
        %v433 = vadd.s32 %v426, 56
        %v434 = vadd.s32 %v426, 64
        %v435 = vadd.s32 %v426, 72
        %v436 = vadd.s32 %v426, 80
        %v437 = vadd.s32 %v426, 88
        %v438 = vadd.s32 %v426, 96
        %v439 = vadd.s32 %v426, 104
        %v440 = vadd.s32 %v426, 112
        %v441 = vadd.s32 %v426, 120
        %v442 = vlaneseq
        %v443 = vshrl.u32 %v442, 7
        %v444 = vsub.s32 0, %v443
        %v445 = vrot.slane %v423, %v444
        %vm446 = vcmp.eq.s32.totalorder %v426, %v445
        %vm447 = vcmp.eq.s32.totalorder %v427, %v445
        %vm448 = vcmp.eq.s32.totalorder %v428, %v445
        %vm449 = vcmp.eq.s32.totalorder %v429, %v445
        %vm450 = vcmp.eq.s32.totalorder %v430, %v445
        %vm451 = vcmp.eq.s32.totalorder %v431, %v445
        %vm452 = vcmp.eq.s32.totalorder %v432, %v445
        %vm453 = vcmp.eq.s32.totalorder %v433, %v445
        %vm454 = vcmp.eq.s32.totalorder %v434, %v445
        %vm455 = vcmp.eq.s32.totalorder %v435, %v445
        %vm456 = vcmp.eq.s32.totalorder %v436, %v445
        %vm457 = vcmp.eq.s32.totalorder %v437, %v445
        %vm458 = vcmp.eq.s32.totalorder %v438, %v445
        %vm459 = vcmp.eq.s32.totalorder %v439, %v445
        %vm460 = vcmp.eq.s32.totalorder %v440, %v445
        %vm461 = vcmp.eq.s32.totalorder %v441, %v445
        %v462 = vsel %vm446, 1.0, 0.0
        %v463 = vsel %vm447, 1.0, 0.0
        %v464 = vsel %vm448, 1.0, 0.0
        %v465 = vsel %vm449, 1.0, 0.0
        %v466 = vsel %vm450, 1.0, 0.0
        %v467 = vsel %vm451, 1.0, 0.0
        %v468 = vsel %vm452, 1.0, 0.0
        %v469 = vsel %vm453, 1.0, 0.0
        %v470 = vsel %vm454, 1.0, 0.0
        %v471 = vsel %vm455, 1.0, 0.0
        %v472 = vsel %vm456, 1.0, 0.0
        %v473 = vsel %vm457, 1.0, 0.0
        %v474 = vsel %vm458, 1.0, 0.0
        %v475 = vsel %vm459, 1.0, 0.0
        %v476 = vsel %vm460, 1.0, 0.0
        %v477 = vsel %vm461, 1.0, 0.0
        %v478 = vpack.c.bf16 %v463, %v462
        %v479 = vpack.c.bf16 %v465, %v464
        %v480 = vpack.c.bf16 %v467, %v466
        %v481 = vpack.c.bf16 %v469, %v468
        %v482 = vpack.c.bf16 %v471, %v470
        %v483 = vpack.c.bf16 %v473, %v472
        %v484 = vpack.c.bf16 %v475, %v474
        %v485 = vpack.c.bf16 %v477, %v476
        %v486 = vlaneseq
        %v487 = vshrl.u32 %v486, 7
        %v488 = vsub.s32 0, %v487
        %v489 = vrot.slane %v424, %v488
        %vm490 = vcmp.eq.s32.totalorder %v426, %v489
        %vm491 = vcmp.eq.s32.totalorder %v427, %v489
        %vm492 = vcmp.eq.s32.totalorder %v428, %v489
        %vm493 = vcmp.eq.s32.totalorder %v429, %v489
        %vm494 = vcmp.eq.s32.totalorder %v430, %v489
        %vm495 = vcmp.eq.s32.totalorder %v431, %v489
        %vm496 = vcmp.eq.s32.totalorder %v432, %v489
        %vm497 = vcmp.eq.s32.totalorder %v433, %v489
        %vm498 = vcmp.eq.s32.totalorder %v434, %v489
        %vm499 = vcmp.eq.s32.totalorder %v435, %v489
        %vm500 = vcmp.eq.s32.totalorder %v436, %v489
        %vm501 = vcmp.eq.s32.totalorder %v437, %v489
        %vm502 = vcmp.eq.s32.totalorder %v438, %v489
        %vm503 = vcmp.eq.s32.totalorder %v439, %v489
        %vm504 = vcmp.eq.s32.totalorder %v440, %v489
        %vm505 = vcmp.eq.s32.totalorder %v441, %v489
        %v506 = vsel %vm490, 1.0, 0.0
        %v507 = vsel %vm491, 1.0, 0.0
        %v508 = vsel %vm492, 1.0, 0.0
        %v509 = vsel %vm493, 1.0, 0.0
        %v510 = vsel %vm494, 1.0, 0.0
        %v511 = vsel %vm495, 1.0, 0.0
        %v512 = vsel %vm496, 1.0, 0.0
        %v513 = vsel %vm497, 1.0, 0.0
        %v514 = vsel %vm498, 1.0, 0.0
        %v515 = vsel %vm499, 1.0, 0.0
        %v516 = vsel %vm500, 1.0, 0.0
        %v517 = vsel %vm501, 1.0, 0.0
        %v518 = vsel %vm502, 1.0, 0.0
        %v519 = vsel %vm503, 1.0, 0.0
        %v520 = vsel %vm504, 1.0, 0.0
        %v521 = vsel %vm505, 1.0, 0.0
        %v522 = vpack.c.bf16 %v507, %v506
        %v523 = vpack.c.bf16 %v509, %v508
        %v524 = vpack.c.bf16 %v511, %v510
        %v525 = vpack.c.bf16 %v513, %v512
        %v526 = vpack.c.bf16 %v515, %v514
        %v527 = vpack.c.bf16 %v517, %v516
        %v528 = vpack.c.bf16 %v519, %v518
        %v529 = vpack.c.bf16 %v521, %v520
        %v532 = vunpack.c.l.b16 %v419
        %v533 = vunpack.c.l.b16 %v420
        %v534 = vpack.c.b16 %v533, %v532
        %536 = vmatprep.subr.bf16.mxu0 0
        %537 = vmatpush1.bf16.msra.mxu0 %v478
        %538 = vmatprep.subr.bf16.mxu0 0
        %539 = vmatpush1.bf16.msra.mxu0 %v479
        %540 = vmatprep.subr.bf16.mxu0 0
        %541 = vmatpush1.bf16.msra.mxu0 %v480
        %542 = vmatprep.subr.bf16.mxu0 0
        %543 = vmatpush1.bf16.msra.mxu0 %v481
        %544 = vmatprep.subr.bf16.mxu0 0
        %545 = vmatpush1.bf16.msra.mxu0 %v482
        %546 = vmatprep.subr.bf16.mxu0 0
        %547 = vmatpush1.bf16.msra.mxu0 %v483
        %548 = vmatprep.subr.bf16.mxu0 0
        %549 = vmatpush1.bf16.msra.mxu0 %v484
        %550 = vmatprep.subr.bf16.mxu0 0
        %551 = vmatpush1.bf16.msra.mxu0 %v485
        %552 = vmatprep.subr.bf16.mxu0 0
        %553 = vmatpush1.bf16.msra.mxu0 0
        %554 = vmatprep.subr.bf16.mxu0 0
        %555 = vmatpush1.bf16.msra.mxu0 0
        %556 = vmatprep.subr.bf16.mxu0 0
        %557 = vmatpush1.bf16.msra.mxu0 0
        %558 = vmatprep.subr.bf16.mxu0 0
        %559 = vmatpush1.bf16.msra.mxu0 0
        %560 = vmatprep.subr.bf16.mxu0 0
        %561 = vmatpush1.bf16.msra.mxu0 0
        %562 = vmatprep.subr.bf16.mxu0 0
        %563 = vmatpush1.bf16.msra.mxu0 0
        %564 = vmatprep.subr.bf16.mxu0 0
        %565 = vmatpush1.bf16.msra.mxu0 0
        %566 = vmatprep.subr.bf16.mxu0 0
        %567 = vmatpush1.bf16.msra.mxu0 0
        %568 = vmatprep.mubr.bf16.mxu0 0
        %569 = vmatmul.mubr.bf16.gmra.mrb[0].mxu0 %v534
        %v570 = vpop.f32.mrb[0].mxu0
        %v571 = vadd.f32 0.0, %v570
        %v572 = vpop.f32.mrb[0].mxu0
        %v573 = vpop.f32.mrb[0].mxu0
        %v574 = vadd.f32 0.0, %v573
        %v575 = vpop.f32.mrb[0].mxu0
        %576 = vdwg.mxu0
        %v579 = vunpack.c.l.b16 %v421
        %v580 = vunpack.c.l.b16 %v422
        %v581 = vpack.c.b16 %v580, %v579
        %583 = vmatprep.subr.bf16.mxu0 0
        %584 = vmatpush1.bf16.msra.mxu0 %v522
        %585 = vmatprep.subr.bf16.mxu0 0
        %586 = vmatpush1.bf16.msra.mxu0 %v523
        %587 = vmatprep.subr.bf16.mxu0 0
        %588 = vmatpush1.bf16.msra.mxu0 %v524
        %589 = vmatprep.subr.bf16.mxu0 0
        %590 = vmatpush1.bf16.msra.mxu0 %v525
        %591 = vmatprep.subr.bf16.mxu0 0
        %592 = vmatpush1.bf16.msra.mxu0 %v526
        %593 = vmatprep.subr.bf16.mxu0 0
        %594 = vmatpush1.bf16.msra.mxu0 %v527
        %595 = vmatprep.subr.bf16.mxu0 0
        %596 = vmatpush1.bf16.msra.mxu0 %v528
        %597 = vmatprep.subr.bf16.mxu0 0
        %598 = vmatpush1.bf16.msra.mxu0 %v529
        %599 = vmatprep.subr.bf16.mxu0 0
        %600 = vmatpush1.bf16.msra.mxu0 0
        %601 = vmatprep.subr.bf16.mxu0 0
        %602 = vmatpush1.bf16.msra.mxu0 0
        %603 = vmatprep.subr.bf16.mxu0 0
        %604 = vmatpush1.bf16.msra.mxu0 0
        %605 = vmatprep.subr.bf16.mxu0 0
        %606 = vmatpush1.bf16.msra.mxu0 0
        %607 = vmatprep.subr.bf16.mxu0 0
        %608 = vmatpush1.bf16.msra.mxu0 0
        %609 = vmatprep.subr.bf16.mxu0 0
        %610 = vmatpush1.bf16.msra.mxu0 0
        %611 = vmatprep.subr.bf16.mxu0 0
        %612 = vmatpush1.bf16.msra.mxu0 0
        %613 = vmatprep.subr.bf16.mxu0 0
        %614 = vmatpush1.bf16.msra.mxu0 0
        %615 = vmatprep.mubr.bf16.mxu0 0
        %616 = vmatmul.mubr.bf16.gmra.mrb[0].mxu0 %v581
        %v617 = vpop.f32.mrb[0].mxu0
        %v618 = vadd.f32 0.0, %v617
        %v619 = vpop.f32.mrb[0].mxu0
        %v620 = vpop.f32.mrb[0].mxu0
        %v621 = vadd.f32 0.0, %v620
        %v622 = vpop.f32.mrb[0].mxu0
        %623 = vdwg.mxu0
        %v624 = vmul.f32 %v571, %v618
        %v625 = vld [vmem:[%s4] sm:$0xff]
        %v626 = vld [vmem:[#allocation8] sm:$0xff]
        %vm627 = vcmask 64512
        %v629 = vsel %vm627, %v626, 0
        %631 = vmatprep.subr.mxu0 0.0
        %632 = vmatpush1.msra.mxu0 %v621
        %633 = vmatprep.subr.mxu0 0.0
        %634 = vmatpush1.msra.mxu0 0.0
        %635 = vmatprep.subr.mxu0 0.0
        %636 = vmatpush1.msra.mxu0 0.0
        %637 = vmatprep.subr.mxu0 0.0
        %638 = vmatpush1.msra.mxu0 0.0
        %639 = vmatprep.subr.mxu0 0.0
        %640 = vmatpush1.msra.mxu0 0.0
        %641 = vmatprep.subr.mxu0 0.0
        %642 = vmatpush1.msra.mxu0 0.0
        %643 = vmatprep.subr.mxu0 0.0
        %644 = vmatpush1.msra.mxu0 0.0
        %645 = vmatprep.subr.mxu0 0.0
        %646 = vmatpush1.msra.mxu0 0.0
        %647 = vmatprep.subr.mxu0 0.0
        %648 = vmatpush1.msra.mxu0 0.0
        %649 = vmatprep.subr.mxu0 0.0
        %650 = vmatpush1.msra.mxu0 0.0
        %651 = vmatprep.subr.mxu0 0.0
        %652 = vmatpush1.msra.mxu0 0.0
        %653 = vmatprep.subr.mxu0 0.0
        %654 = vmatpush1.msra.mxu0 0.0
        %655 = vmatprep.subr.mxu0 0.0
        %656 = vmatpush1.msra.mxu0 0.0
        %657 = vmatprep.subr.mxu0 0.0
        %658 = vmatpush1.msra.mxu0 0.0
        %659 = vmatprep.subr.mxu0 0.0
        %660 = vmatpush1.msra.mxu0 0.0
        %661 = vmatprep.subr.mxu0 0.0
        %662 = vmatpush1.msra.mxu0 0.0
        %663 = vmatprep.subr.mxu0 0.0
        %664 = vmatpush1.msra.mxu0 0.0
        %665 = vmatprep.subr.mxu0 0.0
        %666 = vmatpush1.msra.mxu0 0.0
        %667 = vmatprep.subr.mxu0 0.0
        %668 = vmatpush1.msra.mxu0 0.0
        %669 = vmatprep.subr.mxu0 0.0
        %670 = vmatpush1.msra.mxu0 0.0
        %671 = vmatprep.subr.mxu0 0.0
        %672 = vmatpush1.msra.mxu0 0.0
        %673 = vmatprep.subr.mxu0 0.0
        %674 = vmatpush1.msra.mxu0 0.0
        %675 = vmatprep.subr.mxu0 0.0
        %676 = vmatpush1.msra.mxu0 0.0
        %677 = vmatprep.subr.mxu0 0.0
        %678 = vmatpush1.msra.mxu0 0.0
        %679 = vmatprep.subr.mxu0 0.0
        %680 = vmatpush1.msra.mxu0 0.0
        %681 = vmatprep.subr.mxu0 0.0
        %682 = vmatpush1.msra.mxu0 0.0
        %683 = vmatprep.subr.mxu0 0.0
        %684 = vmatpush1.msra.mxu0 0.0
        %685 = vmatprep.subr.mxu0 0.0
        %686 = vmatpush1.msra.mxu0 0.0
        %687 = vmatprep.subr.mxu0 0.0
        %688 = vmatpush1.msra.mxu0 0.0
        %689 = vmatprep.subr.mxu0 0.0
        %690 = vmatpush1.msra.mxu0 0.0
        %691 = vmatprep.subr.mxu0 0.0
        %692 = vmatpush1.msra.mxu0 0.0
        %693 = vmatprep.subr.mxu0 0.0
        %694 = vmatpush1.msra.mxu0 0.0
        %695 = vmatprep.mubr.f32.mxu0 0.0
        %696 = vmatmul.mubr.f32.gmra.mrb[0].mxu0 %v629
        %v697 = vpop.f32.mrb[0].mxu0
        %v698 = vadd.f32 0.0, %v697
        %v699 = vpop.f32.mrb[0].mxu0
        %700 = vdwg.mxu0
        %v702 = vsel %vm627, %v625, 0
        %704 = vmatprep.subr.mxu0 0.0
        %705 = vmatpush1.msra.mxu0 %v574
        %706 = vmatprep.subr.mxu0 0.0
        %707 = vmatpush1.msra.mxu0 0.0
        %708 = vmatprep.subr.mxu0 0.0
        %709 = vmatpush1.msra.mxu0 0.0
        %710 = vmatprep.subr.mxu0 0.0
        %711 = vmatpush1.msra.mxu0 0.0
        %712 = vmatprep.subr.mxu0 0.0
        %713 = vmatpush1.msra.mxu0 0.0
        %714 = vmatprep.subr.mxu0 0.0
        %715 = vmatpush1.msra.mxu0 0.0
        %716 = vmatprep.subr.mxu0 0.0
        %717 = vmatpush1.msra.mxu0 0.0
        %718 = vmatprep.subr.mxu0 0.0
        %719 = vmatpush1.msra.mxu0 0.0
        %720 = vmatprep.subr.mxu0 0.0
        %721 = vmatpush1.msra.mxu0 0.0
        %722 = vmatprep.subr.mxu0 0.0
        %723 = vmatpush1.msra.mxu0 0.0
        %724 = vmatprep.subr.mxu0 0.0
        %725 = vmatpush1.msra.mxu0 0.0
        %726 = vmatprep.subr.mxu0 0.0
        %727 = vmatpush1.msra.mxu0 0.0
        %728 = vmatprep.subr.mxu0 0.0
        %729 = vmatpush1.msra.mxu0 0.0
        %730 = vmatprep.subr.mxu0 0.0
        %731 = vmatpush1.msra.mxu0 0.0
        %732 = vmatprep.subr.mxu0 0.0
        %733 = vmatpush1.msra.mxu0 0.0
        %734 = vmatprep.subr.mxu0 0.0
        %735 = vmatpush1.msra.mxu0 0.0
        %736 = vmatprep.subr.mxu0 0.0
        %737 = vmatpush1.msra.mxu0 0.0
        %738 = vmatprep.subr.mxu0 0.0
        %739 = vmatpush1.msra.mxu0 0.0
        %740 = vmatprep.subr.mxu0 0.0
        %741 = vmatpush1.msra.mxu0 0.0
        %742 = vmatprep.subr.mxu0 0.0
        %743 = vmatpush1.msra.mxu0 0.0
        %744 = vmatprep.subr.mxu0 0.0
        %745 = vmatpush1.msra.mxu0 0.0
        %746 = vmatprep.subr.mxu0 0.0
        %747 = vmatpush1.msra.mxu0 0.0
        %748 = vmatprep.subr.mxu0 0.0
        %749 = vmatpush1.msra.mxu0 0.0
        %750 = vmatprep.subr.mxu0 0.0
        %751 = vmatpush1.msra.mxu0 0.0
        %752 = vmatprep.subr.mxu0 0.0
        %753 = vmatpush1.msra.mxu0 0.0
        %754 = vmatprep.subr.mxu0 0.0
        %755 = vmatpush1.msra.mxu0 0.0
        %756 = vmatprep.subr.mxu0 0.0
        %757 = vmatpush1.msra.mxu0 0.0
        %758 = vmatprep.subr.mxu0 0.0
        %759 = vmatpush1.msra.mxu0 0.0
        %760 = vmatprep.subr.mxu0 0.0
        %761 = vmatpush1.msra.mxu0 0.0
        %762 = vmatprep.subr.mxu0 0.0
        %763 = vmatpush1.msra.mxu0 0.0
        %764 = vmatprep.subr.mxu0 0.0
        %765 = vmatpush1.msra.mxu0 0.0
        %766 = vmatprep.subr.mxu0 0.0
        %767 = vmatpush1.msra.mxu0 0.0
        %768 = vmatprep.mubr.f32.mxu0 0.0
        %769 = vmatmul.mubr.f32.gmra.mrb[0].mxu0 %v702
        %v770 = vpop.f32.mrb[0].mxu0
        %v771 = vadd.f32 %v698, %v770
        %v772 = vpop.f32.mrb[0].mxu0
        %773 = vdwg.mxu0
        %v774 = vld [vmem:[%s6] sm:$0xff]
        %776 = vset.pattern.permute.xlu0 0
        %777 = vperm.xlu0 %776, %v774
        %v778 = vpop.permute.xlu0 %777
        %v780 = vadd.f32 %v771, %v778
        %v781 = vmax.f32 %v780, 0.0
        %v782 = vld [vmem:[%s7] sm:$0x1]
        %v783 = vld [vmem:[%s8] sm:$0x1]
        %v785 = vsel %vm627, %v783, 0
        %787 = vmatprep.subr.mxu0 0.0
        %788 = vmatpush1.msra.mxu0 %v781
        %789 = vmatprep.subr.mxu0 0.0
        %790 = vmatpush1.msra.mxu0 0.0
        %791 = vmatprep.subr.mxu0 0.0
        %792 = vmatpush1.msra.mxu0 0.0
        %793 = vmatprep.subr.mxu0 0.0
        %794 = vmatpush1.msra.mxu0 0.0
        %795 = vmatprep.subr.mxu0 0.0
        %796 = vmatpush1.msra.mxu0 0.0
        %797 = vmatprep.subr.mxu0 0.0
        %798 = vmatpush1.msra.mxu0 0.0
        %799 = vmatprep.subr.mxu0 0.0
        %800 = vmatpush1.msra.mxu0 0.0
        %801 = vmatprep.subr.mxu0 0.0
        %802 = vmatpush1.msra.mxu0 0.0
        %803 = vmatprep.subr.mxu0 0.0
        %804 = vmatpush1.msra.mxu0 0.0
        %805 = vmatprep.subr.mxu0 0.0
        %806 = vmatpush1.msra.mxu0 0.0
        %807 = vmatprep.subr.mxu0 0.0
        %808 = vmatpush1.msra.mxu0 0.0
        %809 = vmatprep.subr.mxu0 0.0
        %810 = vmatpush1.msra.mxu0 0.0
        %811 = vmatprep.subr.mxu0 0.0
        %812 = vmatpush1.msra.mxu0 0.0
        %813 = vmatprep.subr.mxu0 0.0
        %814 = vmatpush1.msra.mxu0 0.0
        %815 = vmatprep.subr.mxu0 0.0
        %816 = vmatpush1.msra.mxu0 0.0
        %817 = vmatprep.subr.mxu0 0.0
        %818 = vmatpush1.msra.mxu0 0.0
        %819 = vmatprep.subr.mxu0 0.0
        %820 = vmatpush1.msra.mxu0 0.0
        %821 = vmatprep.subr.mxu0 0.0
        %822 = vmatpush1.msra.mxu0 0.0
        %823 = vmatprep.subr.mxu0 0.0
        %824 = vmatpush1.msra.mxu0 0.0
        %825 = vmatprep.subr.mxu0 0.0
        %826 = vmatpush1.msra.mxu0 0.0
        %827 = vmatprep.subr.mxu0 0.0
        %828 = vmatpush1.msra.mxu0 0.0
        %829 = vmatprep.subr.mxu0 0.0
        %830 = vmatpush1.msra.mxu0 0.0
        %831 = vmatprep.subr.mxu0 0.0
        %832 = vmatpush1.msra.mxu0 0.0
        %833 = vmatprep.subr.mxu0 0.0
        %834 = vmatpush1.msra.mxu0 0.0
        %835 = vmatprep.subr.mxu0 0.0
        %836 = vmatpush1.msra.mxu0 0.0
        %837 = vmatprep.subr.mxu0 0.0
        %838 = vmatpush1.msra.mxu0 0.0
        %839 = vmatprep.subr.mxu0 0.0
        %840 = vmatpush1.msra.mxu0 0.0
        %841 = vmatprep.subr.mxu0 0.0
        %842 = vmatpush1.msra.mxu0 0.0
        %843 = vmatprep.subr.mxu0 0.0
        %844 = vmatpush1.msra.mxu0 0.0
        %845 = vmatprep.subr.mxu0 0.0
        %846 = vmatpush1.msra.mxu0 0.0
        %847 = vmatprep.subr.mxu0 0.0
        %848 = vmatpush1.msra.mxu0 0.0
        %849 = vmatprep.subr.mxu0 0.0
        %850 = vmatpush1.msra.mxu0 0.0
        %851 = vmatprep.mubr.f32.mxu0 0.0
        %852 = vmatmul.mubr.f32.gmra.mrb[0].mxu0 %v785
        %v853 = vpop.f32.mrb[0].mxu0
        %v854 = vadd.f32 0.0, %v853
        %v855 = vpop.f32.mrb[0].mxu0
        %856 = vdwg.mxu0
        %v858 = vsel %vm627, %v782, 0
        %860 = vmatprep.subr.mxu0 0.0
        %861 = vmatpush1.msra.mxu0 %v624
        %862 = vmatprep.subr.mxu0 0.0
        %863 = vmatpush1.msra.mxu0 0.0
        %864 = vmatprep.subr.mxu0 0.0
        %865 = vmatpush1.msra.mxu0 0.0
        %866 = vmatprep.subr.mxu0 0.0
        %867 = vmatpush1.msra.mxu0 0.0
        %868 = vmatprep.subr.mxu0 0.0
        %869 = vmatpush1.msra.mxu0 0.0
        %870 = vmatprep.subr.mxu0 0.0
        %871 = vmatpush1.msra.mxu0 0.0
        %872 = vmatprep.subr.mxu0 0.0
        %873 = vmatpush1.msra.mxu0 0.0
        %874 = vmatprep.subr.mxu0 0.0
        %875 = vmatpush1.msra.mxu0 0.0
        %876 = vmatprep.subr.mxu0 0.0
        %877 = vmatpush1.msra.mxu0 0.0
        %878 = vmatprep.subr.mxu0 0.0
        %879 = vmatpush1.msra.mxu0 0.0
        %880 = vmatprep.subr.mxu0 0.0
        %881 = vmatpush1.msra.mxu0 0.0
        %882 = vmatprep.subr.mxu0 0.0
        %883 = vmatpush1.msra.mxu0 0.0
        %884 = vmatprep.subr.mxu0 0.0
        %885 = vmatpush1.msra.mxu0 0.0
        %886 = vmatprep.subr.mxu0 0.0
        %887 = vmatpush1.msra.mxu0 0.0
        %888 = vmatprep.subr.mxu0 0.0
        %889 = vmatpush1.msra.mxu0 0.0
        %890 = vmatprep.subr.mxu0 0.0
        %891 = vmatpush1.msra.mxu0 0.0
        %892 = vmatprep.subr.mxu0 0.0
        %893 = vmatpush1.msra.mxu0 0.0
        %894 = vmatprep.subr.mxu0 0.0
        %895 = vmatpush1.msra.mxu0 0.0
        %896 = vmatprep.subr.mxu0 0.0
        %897 = vmatpush1.msra.mxu0 0.0
        %898 = vmatprep.subr.mxu0 0.0
        %899 = vmatpush1.msra.mxu0 0.0
        %900 = vmatprep.subr.mxu0 0.0
        %901 = vmatpush1.msra.mxu0 0.0
        %902 = vmatprep.subr.mxu0 0.0
        %903 = vmatpush1.msra.mxu0 0.0
        %904 = vmatprep.subr.mxu0 0.0
        %905 = vmatpush1.msra.mxu0 0.0
        %906 = vmatprep.subr.mxu0 0.0
        %907 = vmatpush1.msra.mxu0 0.0
        %908 = vmatprep.subr.mxu0 0.0
        %909 = vmatpush1.msra.mxu0 0.0
        %910 = vmatprep.subr.mxu0 0.0
        %911 = vmatpush1.msra.mxu0 0.0
        %912 = vmatprep.subr.mxu0 0.0
        %913 = vmatpush1.msra.mxu0 0.0
        %914 = vmatprep.subr.mxu0 0.0
        %915 = vmatpush1.msra.mxu0 0.0
        %916 = vmatprep.subr.mxu0 0.0
        %917 = vmatpush1.msra.mxu0 0.0
        %918 = vmatprep.subr.mxu0 0.0
        %919 = vmatpush1.msra.mxu0 0.0
        %920 = vmatprep.subr.mxu0 0.0
        %921 = vmatpush1.msra.mxu0 0.0
        %922 = vmatprep.subr.mxu0 0.0
        %923 = vmatpush1.msra.mxu0 0.0
        %924 = vmatprep.mubr.f32.mxu0 0.0
        %925 = vmatmul.mubr.f32.gmra.mrb[0].mxu0 %v858
        %v926 = vpop.f32.mrb[0].mxu0
        %v927 = vadd.f32 %v854, %v926
        %v928 = vpop.f32.mrb[0].mxu0
        %929 = vdwg.mxu0
        %s930 = sld [smem:[#allocation2]]
        %v931 = vstv %s930
        %v932 = vadd.f32 %v927, %v931
        %933 = vst [vmem:[%s417] sm:$0x1] %v932
        %s934 = sand.u32 %s259, 1
        %s935 = scalar_lea.sflag [#allocation5], %s934
        %s936 = sand.u32 %s259, 1
        %s937 = scalar_lea.vmem [#allocation9], %s936
        // Predicated region
        $region73: #{tpu_custom_call.1} parent=59 // pred_check
          %p938 = pneg %p269
        $region74: #{tpu_custom_call.1} parent=59 // pred_check_branch
          %940 = sbr.rel (%p938) target = $region76
        $region75: #{tpu_custom_call.1} parent=59 // pred_region
          %s942 = ssub.s32 16, 16
          %943 = vsyncadd %s935, %s942
          %s944 = smul.addr %s31, 16
          %s945 = scalar_lea.hbm %s10, %s944
          %s947 = sshll.u32 %s937, 4
          %s948 = int_to_ptr.vmem [resolvable:$true] %s947
          %950 = dma.vmem_to_hbm [thread:$0]  %s948, 16, %s945, %s935
        $region76: #{tpu_custom_call.1} parent=59 // pred_fallthru
          _
      $region60: #{tpu_custom_call.1} parent=5 // pred_fallthru
        _
      %p951 = scmp.le.s32.totalorder 2, %s26
      // Predicated region
      $region77: #{tpu_custom_call.1} parent=5 // pred_check
        %p952 = pneg %p951
      $region78: #{tpu_custom_call.1} parent=5 // pred_check_branch
        %954 = sbr.rel (%p952) target = $region80
      $region79: #{tpu_custom_call.1} parent=5 // pred_region
        %s955 = ssub.s32 %s26, 2
        // Predicated region
        $region81: #{tpu_custom_call.1} parent=79 // pred_check
          %p956 = pneg %p275
        $region82: #{tpu_custom_call.1} parent=79 // pred_check_branch
          %958 = sbr.rel (%p956) target = $region84
        $region83: #{tpu_custom_call.1} parent=79 // pred_region
          %s959 = sand.u32 %s260, 1
          %s960 = scalar_lea.sflag [#allocation5], %s959
          %s961 = sand.u32 %s260, 1
          %s962 = scalar_lea.vmem [#allocation9], %s961
          %963 = dma.done %s960, 16
        $region84: #{tpu_custom_call.1} parent=79 // pred_fallthru
          _
      $region80: #{tpu_custom_call.1} parent=5 // pred_fallthru
        _
    $region6: #{tpu_custom_call.1} parent=1 // loop_footer
      %s30 = sadd.s32 1, %s26
    $region7: #{tpu_custom_call.1} parent=1 // loop_footer_branch
      %25 = sbr.rel target = $region3
    $region8: #{tpu_custom_call.1} parent=1 // loop_exit
      _
    %964 = vsyncpa [#allocation4], 1
    %s965 = scalar_lea.sflag [#allocation4], 1
    %966 = vsyncpa %s965, 1
    %967 = vsyncpa [#allocation7], 1
    %s968 = scalar_lea.sflag [#allocation7], 1
    %969 = vsyncpa %s968, 1
    %970 = vsyncpa [#allocation5], 1
    %s971 = scalar_lea.sflag [#allocation5], 1
    %972 = vsyncpa %s971, 1

</llo_original>
